<compile_context>
chip_gen: v6e
topology: v6e:2x2x1
jax: 0.10.0
libtpu: 0.0.40
codegen_flags: <defaults>
</compile_context>

<pallas_src>
import functools

import jax
import jax.numpy as jnp
from jax.experimental import pallas as pl
from jax.experimental.pallas import tpu as pltpu

N_EMBD = 64
HIDDEN = 4 * N_EMBD  # 256
DROPOUT = 0.1        # unused in eval-mode forward


def _round_up(x, n):
    return ((x + n - 1) // n) * n


def _ffn_kernel(x_ref, w1_ref, b1_ref, w2_ref, b2_ref, o_ref):
    # x_ref:  (tm, n_embd) f32
    # w1_ref: (n_embd, hidden) bf16, b1_ref: (1, hidden) f32
    # w2_ref: (hidden, n_embd) bf16, b2_ref: (1, n_embd) f32
    x = x_ref[...].astype(jnp.bfloat16)                 # bf16 MXU operand
    h = jnp.dot(x, w1_ref[...], preferred_element_type=jnp.float32)
    h = jnp.maximum(h + b1_ref[...], 0.0)               # f32 bias + ReLU (VPU)
    y = jnp.dot(h.astype(jnp.bfloat16), w2_ref[...],
                preferred_element_type=jnp.float32)
    y = y + b2_ref[...]
    # Dropout(p=0.1): identity in eval mode.
    o_ref[...] = y.astype(o_ref.dtype)


@functools.partial(jax.jit, static_argnames=("tm",))
def feed_forward(x, w1, b1, w2, b2, *, tm=512):
    """x: (..., n_embd) -> (..., n_embd), matching the PyTorch module (eval)."""
    orig_shape = x.shape
    n_embd = orig_shape[-1]
    hidden = w1.shape[-1]
    x2d = x.reshape(-1, n_embd)
    m = x2d.shape[0]

    # Tile sizing: multiple of 8 (sublane); 512 fills MXU rows on v5e (128)
    # and v6e/v7x (256). Clamp for tiny inputs so a 16-token call does not
    # pad out to 512 rows, then pad the token axis to a multiple of the tile.
    tm_eff = min(tm, _round_up(m, 8))
    m_pad = _round_up(m, tm_eff)
    if m_pad != m:
        x2d = jnp.pad(x2d, ((0, m_pad - m), (0, 0)))

    grid = (m_pad // tm_eff,)

    flops = 2 * m_pad * n_embd * hidden * 2            # two matmuls
    bytes_accessed = (
        m_pad * n_embd * x.dtype.itemsize * 2          # x in + y out
        + (n_embd * hidden + hidden * n_embd) * 2      # bf16 weights
        + (hidden + n_embd) * 4                        # f32 biases
    )

    out = pl.pallas_call(
        _ffn_kernel,
        out_shape=jax.ShapeDtypeStruct((m_pad, n_embd), x.dtype),
        grid_spec=pltpu.PrefetchScalarGridSpec(
            num_scalar_prefetch=0,
            grid=grid,
            in_specs=[
                pl.BlockSpec((tm_eff, n_embd), lambda i: (i, 0)),    # x tile
                pl.BlockSpec((n_embd, hidden), lambda i: (0, 0)),    # W1 (resident)
                pl.BlockSpec((1, hidden), lambda i: (0, 0)),         # b1
                pl.BlockSpec((hidden, n_embd), lambda i: (0, 0)),    # W2 (resident)
                pl.BlockSpec((1, n_embd), lambda i: (0, 0)),         # b2
            ],
            out_specs=pl.BlockSpec((tm_eff, n_embd), lambda i: (i, 0)),
        ),
        compiler_params=pltpu.CompilerParams(
            dimension_semantics=("parallel",)),
        cost_estimate=pl.CostEstimate(
            flops=flops, transcendentals=0, bytes_accessed=bytes_accessed),
    )(x2d, w1, b1, w2, b2)

    if m_pad != m:
        out = out[:m]
    return out.reshape(orig_shape)


def init_params(key, n_embd=N_EMBD):
    """Init mirroring nn.Linear's U(-1/sqrt(fan_in), 1/sqrt(fan_in)).

    Weights are stored bf16 (MXU operands); biases stay f32 (VPU adds).
    """
    k1, k2, k3, k4 = jax.random.split(key, 4)
    hidden = 4 * n_embd
    lim1 = 1.0 / (n_embd ** 0.5)
    lim2 = 1.0 / (hidden ** 0.5)
    w1 = jax.random.uniform(k1, (n_embd, hidden), jnp.float32, -lim1, lim1)
    b1 = jax.random.uniform(k2, (1, hidden), jnp.float32, -lim1, lim1)
    w2 = jax.random.uniform(k3, (hidden, n_embd), jnp.float32, -lim2, lim2)
    b2 = jax.random.uniform(k4, (1, n_embd), jnp.float32, -lim2, lim2)
    return w1.astype(jnp.bfloat16), b1, w2.astype(jnp.bfloat16), b2


if __name__ == "__main__":
    key = jax.random.PRNGKey(0)
    kx, kp = jax.random.split(key)

    # Small shapes implied by the module: batch=2, seq=8, n_embd=64.
    x = jax.random.normal(kx, (2, 8, N_EMBD), dtype=jnp.float32)
    w1, b1, w2, b2 = init_params(kp)

    y = feed_forward(x, w1, b1, w2, b2)
    y = jax.block_until_ready(y)

    # Pure-JAX reference mirroring the kernel's bf16-operand / f32-accumulate
    # math (eval-mode dropout = identity).
    h = jnp.maximum(
        jnp.dot(x.astype(jnp.bfloat16), w1,
                preferred_element_type=jnp.float32) + b1[0], 0.0)
    ref = jnp.dot(h.astype(jnp.bfloat16), w2,
                  preferred_element_type=jnp.float32) + b2[0]

    assert y.shape == x.shape
    assert jnp.allclose(y, ref, atol=5e-3, rtol=5e-3)

    print("KERNEL_OK")
</pallas_src>

<mosaic_0001>
module attributes {stable_mosaic.version = 11 : i64} {
  func.func @_ffn_kernel(%arg0: i32, %arg1: memref<16x64xf32, #tpu.memory_space<vmem>>, %arg2: memref<64x256xbf16, #tpu.memory_space<vmem>>, %arg3: memref<1x256xf32, #tpu.memory_space<vmem>>, %arg4: memref<256x64xbf16, #tpu.memory_space<vmem>>, %arg5: memref<1x64xf32, #tpu.memory_space<vmem>>, %arg6: memref<16x64xf32, #tpu.memory_space<vmem>>) attributes {dimension_semantics = [#tpu.dimension_semantics<parallel>], iteration_bounds = array<i64: 1>, scalar_prefetch = 0 : i64, scratch_operands = 0 : i64, tpu.core_type = #tpu.core_type<tc>, window_params = [{transform_indices = @transform_0, window_bounds = array<i64: 16, 64>}, {pipeline_mode = #tpu.pipeline_mode<synchronous>, transform_indices = @transform_1, window_bounds = array<i64: 64, 256>}, {pipeline_mode = #tpu.pipeline_mode<synchronous>, transform_indices = @transform_2, window_bounds = array<i64: 1, 256>}, {pipeline_mode = #tpu.pipeline_mode<synchronous>, transform_indices = @transform_3, window_bounds = array<i64: 256, 64>}, {pipeline_mode = #tpu.pipeline_mode<synchronous>, transform_indices = @transform_4, window_bounds = array<i64: 1, 64>}, {transform_indices = @transform_5, window_bounds = array<i64: 16, 64>}]} {
    %c0 = arith.constant 0 : index
    %c0_0 = arith.constant 0 : index
    %0 = vector.load %arg1[%c0, %c0_0] : memref<16x64xf32, #tpu.memory_space<vmem>>, vector<16x64xf32>
    %1 = arith.truncf %0 : vector<16x64xf32> to vector<16x64xbf16>
    %c0_1 = arith.constant 0 : index
    %c0_2 = arith.constant 0 : index
    %2 = vector.load %arg2[%c0_1, %c0_2] : memref<64x256xbf16, #tpu.memory_space<vmem>>, vector<64x256xbf16>
    %cst = arith.constant dense<0.000000e+00> : vector<16x256xf32>
    %3 = tpu.matmul %1, %2, %cst {dimension_numbers = #tpu.dot_dimension_numbers<[1], [0], [0], [1], [0, 0, 1, 1], [], []>} : vector<16x64xbf16>, vector<64x256xbf16>, vector<16x256xf32> -> vector<16x256xf32>
    %c0_3 = arith.constant 0 : index
    %c0_4 = arith.constant 0 : index
    %4 = vector.load %arg3[%c0_3, %c0_4] : memref<1x256xf32, #tpu.memory_space<vmem>>, vector<1x256xf32>
    %5 = vector.broadcast %4 : vector<1x256xf32> to vector<16x256xf32>
    %6 = arith.addf %3, %5 : vector<16x256xf32>
    %cst_5 = arith.constant 0.000000e+00 : f32
    %7 = vector.broadcast %cst_5 : f32 to vector<16x256xf32>
    %8 = arith.maximumf %6, %7 : vector<16x256xf32>
    %9 = arith.truncf %8 : vector<16x256xf32> to vector<16x256xbf16>
    %c0_6 = arith.constant 0 : index
    %c0_7 = arith.constant 0 : index
    %10 = vector.load %arg4[%c0_6, %c0_7] : memref<256x64xbf16, #tpu.memory_space<vmem>>, vector<256x64xbf16>
    %cst_8 = arith.constant dense<0.000000e+00> : vector<16x64xf32>
    %11 = tpu.matmul %9, %10, %cst_8 {dimension_numbers = #tpu.dot_dimension_numbers<[1], [0], [0], [1], [0, 0, 1, 1], [], []>} : vector<16x256xbf16>, vector<256x64xbf16>, vector<16x64xf32> -> vector<16x64xf32>
    %c0_9 = arith.constant 0 : index
    %c0_10 = arith.constant 0 : index
    %12 = vector.load %arg5[%c0_9, %c0_10] : memref<1x64xf32, #tpu.memory_space<vmem>>, vector<1x64xf32>
    %13 = vector.broadcast %12 : vector<1x64xf32> to vector<16x64xf32>
    %14 = arith.addf %11, %13 : vector<16x64xf32>
    %c0_11 = arith.constant 0 : index
    %c0_12 = arith.constant 0 : index
    %15 = vector.load %arg6[%c0_11, %c0_12] : memref<16x64xf32, #tpu.memory_space<vmem>>, vector<16x64xf32>
    tpu.vector_store %arg6[%c0_11, %c0_12], %14 {strides = array<i32>} : memref<16x64xf32, #tpu.memory_space<vmem>>, vector<16x64xf32>,
    return
  }
  func.func @transform_0(%arg0: i32) -> (i32, i32) {
    %c0_i32 = arith.constant 0 : i32
    %c0_i32_0 = arith.constant 0 : i32
    return %arg0, %c0_i32 : i32, i32
  }
  func.func @transform_1(%arg0: i32) -> (i32, i32) {
    %c0_i32 = arith.constant 0 : i32
    %c0_i32_0 = arith.constant 0 : i32
    %c0_i32_1 = arith.constant 0 : i32
    return %c0_i32, %c0_i32_0 : i32, i32
  }
  func.func @transform_2(%arg0: i32) -> (i32, i32) {
    %c0_i32 = arith.constant 0 : i32
    %c0_i32_0 = arith.constant 0 : i32
    %c0_i32_1 = arith.constant 0 : i32
    return %c0_i32, %c0_i32_0 : i32, i32
  }
  func.func @transform_3(%arg0: i32) -> (i32, i32) {
    %c0_i32 = arith.constant 0 : i32
    %c0_i32_0 = arith.constant 0 : i32
    %c0_i32_1 = arith.constant 0 : i32
    return %c0_i32, %c0_i32_0 : i32, i32
  }
  func.func @transform_4(%arg0: i32) -> (i32, i32) {
    %c0_i32 = arith.constant 0 : i32
    %c0_i32_0 = arith.constant 0 : i32
    %c0_i32_1 = arith.constant 0 : i32
    return %c0_i32, %c0_i32_0 : i32, i32
  }
  func.func @transform_5(%arg0: i32) -> (i32, i32) {
    %c0_i32 = arith.constant 0 : i32
    %c0_i32_0 = arith.constant 0 : i32
    return %arg0, %c0_i32 : i32, i32
  }
}

</mosaic_0001>

<llo_original>
// kernel: feed_forward.1
$region0: #{feed_forward.1}
  #allocation0 [shape = 'u32[]', space=smem, size = 0x4, offset = 0x4, fixed_abs, tag = 'smem constant byte address 0x4 - core index']
  #allocation1 [shape = 'u32[144,128]{1,0:T(1,128)}', space=vmem, size = 0x12000, scoped, tag = 'internal scratch']
  %s0 = inlined_call_operand.vmem [shape: f32[16,64], index: 0, kind: input, shape index: {}]
  %s1 = inlined_call_operand.vmem [shape: bf16[64,256], index: 1, kind: input, shape index: {}]
  %s2 = inlined_call_operand.vmem [shape: f32[1,256], index: 2, kind: input, shape index: {}]
  %s3 = inlined_call_operand.vmem [shape: bf16[256,64], index: 3, kind: input, shape index: {}]
  %s4 = inlined_call_operand.vmem [shape: f32[1,64], index: 4, kind: input, shape index: {}]
  %s5 = inlined_call_operand.hbm [shape: f32[16,64], index: 5, kind: output, shape index: {}]
  %s6 = sld [smem:[#allocation0]]
  $region30: #{feed_forward.1} parent=0
    _
  %s8 = ssub.s32 1, %s6
  %s9 = scalar_select 0, %s8, %s6
  $region1: #{feed_forward.1} parent=0
    #allocation2 [shape = 'u8[8192]{0}', space=vmem, size = 0x2000, scoped, tag = 'output window, operand 0, single buffered']
    #allocation3 [shape = 's32[1]{0}', space=sflag, size = 0x4, scoped, tag = 'scoped memory for feed_forward.1']
    %10 = vsyncpa [#allocation3], 0
    // Predicated region
    $region2: #{feed_forward.1} parent=1 // pred_check
      _
    $region3: #{feed_forward.1} parent=1 // pred_check_branch
      %12 = sbr.rel (0) target = $region5
    $region4: #{feed_forward.1} parent=1 // pred_region
      _
    $region5: #{feed_forward.1} parent=1 // pred_fallthru
      _
    // Predicated region
    $region6: #{feed_forward.1} parent=1 // pred_check
      _
    $region7: #{feed_forward.1} parent=1 // pred_check_branch
      %14 = sbr.rel (0) target = $region9
    $region8: #{feed_forward.1} parent=1 // pred_region
      _
    $region9: #{feed_forward.1} parent=1 // pred_fallthru
      _
    // Predicated region
    $region10: #{feed_forward.1} parent=1 // pred_check
      _
    $region11: #{feed_forward.1} parent=1 // pred_check_branch
      %16 = sbr.rel (0) target = $region13
    $region12: #{feed_forward.1} parent=1 // pred_region
      _
    $region13: #{feed_forward.1} parent=1 // pred_fallthru
      _
    // Predicated region
    $region14: #{feed_forward.1} parent=1 // pred_check
      _
    $region15: #{feed_forward.1} parent=1 // pred_check_branch
      %18 = sbr.rel (0) target = $region17
    $region16: #{feed_forward.1} parent=1 // pred_region
      _
    $region17: #{feed_forward.1} parent=1 // pred_fallthru
      _
    // Predicated region
    $region18: #{feed_forward.1} parent=1 // pred_check
      _
    $region19: #{feed_forward.1} parent=1 // pred_check_branch
      %20 = sbr.rel (0) target = $region21
    $region20: #{feed_forward.1} parent=1 // pred_region
      _
    $region21: #{feed_forward.1} parent=1 // pred_fallthru
      _
    %v22 = vld [vmem:[%s0] sm:$0xff]
    %v23 = vld [vmem:[%s0 + $0x8] sm:$0xff]
    %v24 = vpack.c.bf16 %v23, %v22
    %v25 = vld [vmem:[%s1] sm:$0xff]
    %v26 = vld [vmem:[%s1 + $0x8] sm:$0xff]
    %v27 = vld [vmem:[%s1 + $0x10] sm:$0xff]
    %v28 = vld [vmem:[%s1 + $0x18] sm:$0xff]
    %v29 = vld [vmem:[%s1 + $0x20] sm:$0xff]
    %v30 = vld [vmem:[%s1 + $0x28] sm:$0xff]
    %v31 = vld [vmem:[%s1 + $0x30] sm:$0xff]
    %v32 = vld [vmem:[%s1 + $0x38] sm:$0xff]
    %v33 = vld [vmem:[%s2] sm:$0x3]
    %v35 = vlaneseq
    %v36 = vshrl.u32 %v35, 7
    %v37 = vsub.s32 0, %v36
    %v38 = vrot.slane %v33, %v37
    %v39 = vlaneseq
    %v40 = vshrl.u32 %v39, 7
    %v41 = vsub.s32 1, %v40
    %v42 = vrot.slane %v33, %v41
    %v53 = vunpack.c.l.b16 %v25
    %v54 = vunpack.c.h.b16 %v25
    %v55 = vunpack.c.l.b16 %v26
    %v56 = vunpack.c.h.b16 %v26
    %v57 = vunpack.c.l.b16 %v27
    %v58 = vunpack.c.h.b16 %v27
    %v59 = vunpack.c.l.b16 %v28
    %v60 = vunpack.c.h.b16 %v28
    %v61 = vunpack.c.l.b16 %v29
    %v62 = vunpack.c.h.b16 %v29
    %v63 = vunpack.c.l.b16 %v30
    %v64 = vunpack.c.h.b16 %v30
    %v65 = vunpack.c.l.b16 %v31
    %v66 = vunpack.c.h.b16 %v31
    %v67 = vunpack.c.l.b16 %v32
    %v68 = vunpack.c.h.b16 %v32
    %v69 = vpack.c.b16 %v55, %v53
    %v70 = vpack.c.b16 %v56, %v54
    %v71 = vpack.c.b16 %v59, %v57
    %v72 = vpack.c.b16 %v60, %v58
    %v73 = vpack.c.b16 %v63, %v61
    %v74 = vpack.c.b16 %v64, %v62
    %v75 = vpack.c.b16 %v67, %v65
    %v76 = vpack.c.b16 %v68, %v66
    %vm85 = vcmask 523264
    %v87 = vsel %vm85, %v24, 0
    %89 = vmatprep.subr.bf16.mxu0 0
    %90 = vmatpush1.bf16.msra.mxu0 0
    %91 = vmatprep.subr.bf16.mxu0 0
    %92 = vmatpush1.bf16.msra.mxu0 0
    %93 = vmatprep.subr.bf16.mxu0 0
    %94 = vmatpush1.bf16.msra.mxu0 0
    %95 = vmatprep.subr.bf16.mxu0 0
    %96 = vmatpush1.bf16.msra.mxu0 0
    %97 = vmatprep.subr.bf16.mxu0 %v76
    %98 = vmatpush1.bf16.msra.mxu0 %v75
    %99 = vmatprep.subr.bf16.mxu0 %v74
    %100 = vmatpush1.bf16.msra.mxu0 %v73
    %101 = vmatprep.subr.bf16.mxu0 %v72
    %102 = vmatpush1.bf16.msra.mxu0 %v71
    %103 = vmatprep.subr.bf16.mxu0 %v70
    %104 = vmatpush1.bf16.msra.mxu0 %v69
    %105 = vmatprep.subr.bf16.mxu0 0
    %106 = vmatpush2.bf16.msra.mxu0 0
    %107 = vmatprep.subr.bf16.mxu0 0
    %108 = vmatpush2.bf16.msra.mxu0 0
    %109 = vmatprep.subr.bf16.mxu0 0
    %110 = vmatpush2.bf16.msra.mxu0 0
    %111 = vmatprep.subr.bf16.mxu0 0
    %112 = vmatpush2.bf16.msra.mxu0 0
    %113 = vmatprep.subr.bf16.mxu0 0
    %114 = vmatpush2.bf16.msra.mxu0 0
    %115 = vmatprep.subr.bf16.mxu0 0
    %116 = vmatpush2.bf16.msra.mxu0 0
    %117 = vmatprep.subr.bf16.mxu0 0
    %118 = vmatpush2.bf16.msra.mxu0 0
    %119 = vmatprep.subr.bf16.mxu0 0
    %120 = vmatpush2.bf16.msra.mxu0 0
    %121 = vmatprep.mubr.bf16.mxu0 0
    %122 = vmatmul.mubr.bf16.gmra.mxu0 %v87
    %v123 = vpop.f32.mrf.mxu0
    %v124 = vadd.f32 %v38, %v123
    %v125 = vpop.f32.mrf.mxu0
    %v126 = vadd.f32 %v42, %v125
    %v127 = vpop.f32.mrf.mxu0
    %v128 = vadd.f32 %v38, %v127
    %v129 = vpop.f32.mrf.mxu0
    %v130 = vadd.f32 %v42, %v129
    %131 = vdwg.mxu0
    %v132 = vmax.f32 %v124, 0.0
    %v133 = vmax.f32 %v126, 0.0
    %v134 = vmax.f32 %v128, 0.0
    %v135 = vmax.f32 %v130, 0.0
    %v136 = vpack.c.bf16 %v134, %v132
    %v137 = vpack.c.bf16 %v135, %v133
    %v138 = vld [vmem:[%s3] sm:$0xf]
    %v139 = vld [vmem:[%s3 + $0x4] sm:$0xf]
    %v140 = vld [vmem:[%s3 + $0x8] sm:$0xf]
    %v141 = vld [vmem:[%s3 + $0xc] sm:$0xf]
    %v142 = vld [vmem:[%s3 + $0x10] sm:$0xf]
    %v143 = vld [vmem:[%s3 + $0x14] sm:$0xf]
    %v144 = vld [vmem:[%s3 + $0x18] sm:$0xf]
    %v145 = vld [vmem:[%s3 + $0x1c] sm:$0xf]
    %v146 = vld [vmem:[%s3 + $0x20] sm:$0xf]
    %v147 = vld [vmem:[%s3 + $0x24] sm:$0xf]
    %v148 = vld [vmem:[%s3 + $0x28] sm:$0xf]
    %v149 = vld [vmem:[%s3 + $0x2c] sm:$0xf]
    %v150 = vld [vmem:[%s3 + $0x30] sm:$0xf]
    %v151 = vld [vmem:[%s3 + $0x34] sm:$0xf]
    %v152 = vld [vmem:[%s3 + $0x38] sm:$0xf]
    %v153 = vld [vmem:[%s3 + $0x3c] sm:$0xf]
    %v154 = vld [vmem:[%s3 + $0x40] sm:$0xf]
    %v155 = vld [vmem:[%s3 + $0x44] sm:$0xf]
    %v156 = vld [vmem:[%s3 + $0x48] sm:$0xf]
    %v157 = vld [vmem:[%s3 + $0x4c] sm:$0xf]
    %v158 = vld [vmem:[%s3 + $0x50] sm:$0xf]
    %v159 = vld [vmem:[%s3 + $0x54] sm:$0xf]
    %v160 = vld [vmem:[%s3 + $0x58] sm:$0xf]
    %v161 = vld [vmem:[%s3 + $0x5c] sm:$0xf]
    %v162 = vld [vmem:[%s3 + $0x60] sm:$0xf]
    %v163 = vld [vmem:[%s3 + $0x64] sm:$0xf]
    %v164 = vld [vmem:[%s3 + $0x68] sm:$0xf]
    %v165 = vld [vmem:[%s3 + $0x6c] sm:$0xf]
    %v166 = vld [vmem:[%s3 + $0x70] sm:$0xf]
    %v167 = vld [vmem:[%s3 + $0x74] sm:$0xf]
    %v168 = vld [vmem:[%s3 + $0x78] sm:$0xf]
    %v169 = vld [vmem:[%s3 + $0x7c] sm:$0xf]
    %v170 = vld [vmem:[%s4] sm:$0x1]
    %v172 = vlaneseq
    %v173 = vshrl.u32 %v172, 7
    %v174 = vsub.s32 0, %v173
    %v175 = vrot.slane %v170, %v174
    %v209 = vunpack.c.l.b16 %v138
    %v210 = vunpack.c.l.b16 %v139
    %v211 = vunpack.c.l.b16 %v140
    %v212 = vunpack.c.l.b16 %v141
    %v213 = vunpack.c.l.b16 %v142
    %v214 = vunpack.c.l.b16 %v143
    %v215 = vunpack.c.l.b16 %v144
    %v216 = vunpack.c.l.b16 %v145
    %v217 = vunpack.c.l.b16 %v146
    %v218 = vunpack.c.l.b16 %v147
    %v219 = vunpack.c.l.b16 %v148
    %v220 = vunpack.c.l.b16 %v149
    %v221 = vunpack.c.l.b16 %v150
    %v222 = vunpack.c.l.b16 %v151
    %v223 = vunpack.c.l.b16 %v152
    %v224 = vunpack.c.l.b16 %v153
    %v225 = vunpack.c.l.b16 %v154
    %v226 = vunpack.c.l.b16 %v155
    %v227 = vunpack.c.l.b16 %v156
    %v228 = vunpack.c.l.b16 %v157
    %v229 = vunpack.c.l.b16 %v158
    %v230 = vunpack.c.l.b16 %v159
    %v231 = vunpack.c.l.b16 %v160
    %v232 = vunpack.c.l.b16 %v161
    %v233 = vunpack.c.l.b16 %v162
    %v234 = vunpack.c.l.b16 %v163
    %v235 = vunpack.c.l.b16 %v164
    %v236 = vunpack.c.l.b16 %v165
    %v237 = vunpack.c.l.b16 %v166
    %v238 = vunpack.c.l.b16 %v167
    %v239 = vunpack.c.l.b16 %v168
    %v240 = vunpack.c.l.b16 %v169
    %v241 = vpack.c.b16 %v210, %v209
    %v242 = vpack.c.b16 %v212, %v211
    %v243 = vpack.c.b16 %v214, %v213
    %v244 = vpack.c.b16 %v216, %v215
    %v245 = vpack.c.b16 %v218, %v217
    %v246 = vpack.c.b16 %v220, %v219
    %v247 = vpack.c.b16 %v222, %v221
    %v248 = vpack.c.b16 %v224, %v223
    %v249 = vpack.c.b16 %v226, %v225
    %v250 = vpack.c.b16 %v228, %v227
    %v251 = vpack.c.b16 %v230, %v229
    %v252 = vpack.c.b16 %v232, %v231
    %v253 = vpack.c.b16 %v234, %v233
    %v254 = vpack.c.b16 %v236, %v235
    %v255 = vpack.c.b16 %v238, %v237
    %v256 = vpack.c.b16 %v240, %v239
    %273 = vmatprep.subr.bf16.mxu0 0
    %274 = vmatpush1.bf16.msra.mxu0 %v248
    %275 = vmatprep.subr.bf16.mxu0 0
    %276 = vmatpush1.bf16.msra.mxu0 %v247
    %277 = vmatprep.subr.bf16.mxu0 0
    %278 = vmatpush1.bf16.msra.mxu0 %v246
    %279 = vmatprep.subr.bf16.mxu0 0
    %280 = vmatpush1.bf16.msra.mxu0 %v245
    %281 = vmatprep.subr.bf16.mxu0 0
    %282 = vmatpush1.bf16.msra.mxu0 %v244
    %283 = vmatprep.subr.bf16.mxu0 0
    %284 = vmatpush1.bf16.msra.mxu0 %v243
    %285 = vmatprep.subr.bf16.mxu0 0
    %286 = vmatpush1.bf16.msra.mxu0 %v242
    %287 = vmatprep.subr.bf16.mxu0 0
    %288 = vmatpush1.bf16.msra.mxu0 %v241
    %289 = vmatprep.subr.bf16.mxu0 0
    %290 = vmatpush2.bf16.msra.mxu0 %v256
    %291 = vmatprep.subr.bf16.mxu0 0
    %292 = vmatpush2.bf16.msra.mxu0 %v255
    %293 = vmatprep.subr.bf16.mxu0 0
    %294 = vmatpush2.bf16.msra.mxu0 %v254
    %295 = vmatprep.subr.bf16.mxu0 0
    %296 = vmatpush2.bf16.msra.mxu0 %v253
    %297 = vmatprep.subr.bf16.mxu0 0
    %298 = vmatpush2.bf16.msra.mxu0 %v252
    %299 = vmatprep.subr.bf16.mxu0 0
    %300 = vmatpush2.bf16.msra.mxu0 %v251
    %301 = vmatprep.subr.bf16.mxu0 0
    %302 = vmatpush2.bf16.msra.mxu0 %v250
    %303 = vmatprep.subr.bf16.mxu0 0
    %304 = vmatpush2.bf16.msra.mxu0 %v249
    %305 = vmatprep.mubr.bf16.mxu0 %v137
    %306 = vmatmul.mubr.bf16.gmra.mxu0 %v136
    %v307 = vpop.f32.mrf.mxu0
    %v308 = vadd.f32 %v175, %v307
    %v309 = vpop.f32.mrf.mxu0
    %v310 = vpop.f32.mrf.mxu0
    %v311 = vadd.f32 %v175, %v310
    %v312 = vpop.f32.mrf.mxu0
    %313 = vdwg.mxu0
    %314 = vst.msk [vmem:[#allocation2] sm:$0xff] %vm85, %v308
    %315 = vst.msk [vmem:[#allocation2 + $0x8] sm:$0xff] %vm85, %v311
    // Predicated region
    $region22: #{feed_forward.1} parent=1 // pred_check
      _
    $region23: #{feed_forward.1} parent=1 // pred_check_branch
      %317 = sbr.rel (0) target = $region25
    $region24: #{feed_forward.1} parent=1 // pred_region
      %s319 = ssub.s32 256, 256
      %320 = vsyncadd [#allocation3], %s319
      %s321 = sshll.u32 [#allocation2], 4
      %s322 = int_to_ptr.vmem [resolvable:$true] %s321
      %327 = dma.vmem_to_hbm [thread:$0]  %s322, 256, %s5, [#allocation3], 128, 128, 8
    $region25: #{feed_forward.1} parent=1 // pred_fallthru
      _
    // Predicated region
    $region26: #{feed_forward.1} parent=1 // pred_check
      _
    $region27: #{feed_forward.1} parent=1 // pred_check_branch
      %329 = sbr.rel (0) target = $region29
    $region28: #{feed_forward.1} parent=1 // pred_region
      %330 = dma.done [#allocation3], 256
    $region29: #{feed_forward.1} parent=1 // pred_fallthru
      _
    %331 = vsyncpa [#allocation3], 1

</llo_original>
